<compile_context>
chip_gen: v7x
topology: tpu7x:2x2x1
jax: 0.10.0
libtpu: 0.0.40
codegen_flags: <defaults>
</compile_context>

<pallas_src>
import functools

import numpy as np
import jax
import jax.numpy as jnp
from jax.experimental import pallas as pl
from jax.experimental.pallas import tpu as pltpu


# ----------------------------- Pallas kernels -----------------------------

def _affine_kernel(w_ref, fcw_ref, fcb_ref, out_ref, *, c_in, style_gain):
    """StyleSplit fused: one wide FC (w @ [W1|W2|W3]) -> m1*m2 + m3, scaled."""
    y = jnp.dot(w_ref[...], fcw_ref[...], preferred_element_type=jnp.float32)
    y = y + fcb_ref[...]                          # (B, 3*C_in)
    m1 = y[:, 0 * c_in:1 * c_in]
    m2 = y[:, 1 * c_in:2 * c_in]
    m3 = y[:, 2 * c_in:3 * c_in]
    out_ref[...] = ((m1 * m2 + m3) * style_gain).astype(out_ref.dtype)


def _torgb_kernel(x_ref, s_ref, w_ref, b_ref, o_ref, *, clamp):
    """Modulated 1x1 conv (demodulate=False) + bias (+ optional clamp).

    Block view: x (1, C_in, T) -> out (1, C_out, T). Style modulation is folded
    into the (tiny) weight, equivalent to fused_modconv grouped conv for k=1.
    """
    x = x_ref[0]                                              # (C_in, T)
    wm = (w_ref[...] * s_ref[0]).astype(x.dtype)              # (C_out, C_in)
    y = jnp.dot(wm, x, preferred_element_type=jnp.float32)    # (C_out, T)
    y = y + b_ref[...]                                        # (C_out, 1) broadcast
    if clamp is not None:
        y = jnp.clip(y, -clamp, clamp)
    o_ref[0] = y.astype(o_ref.dtype)


# ----------------------------- tiling helper -------------------------------

def _pick_hw_tile(hw, c_in, c_out, dtype_size, max_hw_tile):
    """Largest lane-dense spatial tile T with HW % T == 0 that fits the
    double-buffered VMEM budget on all TPU generations (v5e/v6e/v7x)."""
    budget = 12 * 1024 * 1024                       # in+out, double-buffered
    per_lane = 2 * (c_in + c_out) * max(dtype_size, 4)
    cap = (budget // per_lane) // 128 * 128
    cap = max(128, min(int(max_hw_tile), int(cap)))
    if hw <= cap:
        return hw                                   # full spatial block
    t = cap
    while t >= 128:
        if hw % t == 0:
            return t
        t -= 128
    return hw  # irregular spatial size: fall back to one full block
    # TODO(synk): could zero-pad HW to a multiple of 128 for odd resolutions.


# ------------------------------ Module wrapper -----------------------------

class ToRGBLayerPallas:
    def __init__(self, in_channels, out_channels, w_dim, kernel_size=1,
                 conv_clamp=None, use_bf16=False, key=None):
        # ToRGB always uses a 1x1 kernel; that is what the Pallas kernel implements.
        assert kernel_size == 1, "ToRGBLayer uses kernel_size=1"
        self.in_channels = in_channels
        self.out_channels = out_channels
        self.w_dim = w_dim
        self.conv_clamp = conv_clamp
        self.use_bf16 = use_bf16

        k1, k2 = jax.random.split(key, 2)
        # StyleSplit.proj = FullyConnectedLayer(w_dim, 3*in_channels, bias_init=1)
        #   weight ~ randn(3*C_in, w_dim), runtime-scaled by 1/sqrt(w_dim); bias = 1.
        self.fc_weight = jax.random.normal(k1, (3 * in_channels, w_dim), jnp.float32)
        self.fc_bias = jnp.ones((3 * in_channels,), jnp.float32)
        self.fc_weight_gain = 1.0 / np.sqrt(w_dim)
        # conv weight: 0.1 * randn(C_out, C_in, 1, 1); bias = zeros(C_out)
        self.weight = 0.1 * jax.random.normal(
            k2, (out_channels, in_channels, kernel_size, kernel_size), jnp.float32)
        self.bias = jnp.zeros((out_channels,), jnp.float32)
        self.weight_gain = 1.0 / np.sqrt(in_channels * kernel_size ** 2)

        # --- static parameter glue precomputed ONCE (not per forward) ---
        self.fcw_cat = (self.fc_weight * self.fc_weight_gain).T        # (w_dim, 3*C_in)
        self.fcb_cat = self.fc_bias.reshape(1, 3 * in_channels)        # (1, 3*C_in)
        self.w2d = self.weight.reshape(out_channels, in_channels)      # (C_out, C_in)
        self.bias2d = self.bias.reshape(out_channels, 1)               # (C_out, 1)

    # ------------------------------------------------------------------
    def __call__(self, x, w, max_hw_tile=2048):
        B, C_in, H, W = x.shape
        assert C_in == self.in_channels and w.shape == (B, self.w_dim)
        C_out = self.out_channels
        HW = H * W

        # --- fused StyleSplit affine in Pallas (single wide matmul) ---
        styles = pl.pallas_call(
            functools.partial(_affine_kernel, c_in=C_in,
                              style_gain=self.weight_gain),
            out_shape=jax.ShapeDtypeStruct((B, C_in), jnp.float32),
        )(w, self.fcw_cat, self.fcb_cat)

        # --- modulated 1x1 conv + bias, tiled over (batch, spatial) ---
        compute_dtype = jnp.bfloat16 if self.use_bf16 else x.dtype
        dsz = jnp.dtype(compute_dtype).itemsize
        x_flat = x.reshape(B, C_in, HW).astype(compute_dtype)
        styles3 = styles.reshape(B, 1, C_in)        # keep last-2 dims == full dims

        T = _pick_hw_tile(HW, C_in, C_out, dsz, max_hw_tile)
        num_t = HW // T

        cost = pl.CostEstimate(
            flops=2 * B * C_out * C_in * HW,
            transcendentals=0,
            bytes_accessed=(B * C_in * HW + B * C_out * HW) * dsz
                           + (C_out * C_in + B * C_in + C_out) * 4,
        )

        out = pl.pallas_call(
            functools.partial(_torgb_kernel, clamp=self.conv_clamp),
            grid=(B, num_t),
            in_specs=[
                pl.BlockSpec((1, C_in, T), lambda b, t: (b, 0, t)),
                pl.BlockSpec((1, 1, C_in), lambda b, t: (b, 0, 0)),
                pl.BlockSpec((C_out, C_in), lambda b, t: (0, 0)),
                pl.BlockSpec((C_out, 1), lambda b, t: (0, 0)),
            ],
            out_specs=pl.BlockSpec((1, C_out, T), lambda b, t: (b, 0, t)),
            out_shape=jax.ShapeDtypeStruct((B, C_out, HW), compute_dtype),
            compiler_params=pltpu.CompilerParams(
                dimension_semantics=("parallel", "parallel")),
            cost_estimate=cost,
        )(x_flat, styles3, self.w2d, self.bias2d)

        return out.reshape(B, C_out, H, W)

    # Pure-JAX reference of the same forward (for verification).
    def reference(self, x, w):
        B, C_in, H, W = x.shape
        y = w @ (self.fc_weight * self.fc_weight_gain).T + self.fc_bias
        m1, m2, m3 = jnp.split(y, 3, axis=1)
        styles = (m1 * m2 + m3) * self.weight_gain                      # (B, C_in)
        wmat = self.weight.reshape(self.out_channels, C_in)             # 1x1 conv
        out = jnp.einsum('oi,bi,bihw->bohw', wmat, styles, x)
        out = out + self.bias[None, :, None, None]
        if self.conv_clamp is not None:
            out = jnp.clip(out, -self.conv_clamp, self.conv_clamp)
        return out


# ----------------------------------- main ----------------------------------

if __name__ == "__main__":
    B, C_IN, C_OUT, W_DIM, H = 2, 8, 3, 32, 16

    key = jax.random.PRNGKey(0)
    k_param, k_x, k_w = jax.random.split(key, 3)

    layer = ToRGBLayerPallas(in_channels=C_IN, out_channels=C_OUT, w_dim=W_DIM,
                             kernel_size=1, conv_clamp=None, key=k_param)

    x = jax.random.normal(k_x, (B, C_IN, H, H), jnp.float32)   # NCHW
    w = jax.random.normal(k_w, (B, W_DIM), jnp.float32)

    ref = layer.reference(x, w)

    # Default path (tile fits whole spatial extent at this small size).
    out = jax.block_until_ready(layer(x, w))
    np.testing.assert_allclose(np.asarray(out), np.asarray(ref), rtol=1e-5, atol=1e-5)

    # Force the multi-tile spatial grid (HW=256 split into 128-lane tiles).
    out_tiled = jax.block_until_ready(layer(x, w, max_hw_tile=128))
    np.testing.assert_allclose(np.asarray(out_tiled), np.asarray(ref),
                               rtol=1e-5, atol=1e-5)

    print("KERNEL_OK")
</pallas_src>

<mosaic_0001>
module attributes {stable_mosaic.version = 11 : i64} {
  func.func @_affine_kernel(%arg0: memref<2x32xf32, #tpu.memory_space<vmem>>, %arg1: memref<32x24xf32, #tpu.memory_space<vmem>>, %arg2: memref<1x24xf32, #tpu.memory_space<vmem>>, %arg3: memref<2x8xf32, #tpu.memory_space<vmem>>) attributes {dimension_semantics = [], scalar_prefetch = 0 : i64, scratch_operands = 0 : i64, tpu.core_type = #tpu.core_type<tc>} {
    %c0 = arith.constant 0 : index
    %c0_0 = arith.constant 0 : index
    %0 = vector.load %arg0[%c0, %c0_0] : memref<2x32xf32, #tpu.memory_space<vmem>>, vector<2x32xf32>
    %c0_1 = arith.constant 0 : index
    %c0_2 = arith.constant 0 : index
    %1 = vector.load %arg1[%c0_1, %c0_2] : memref<32x24xf32, #tpu.memory_space<vmem>>, vector<32x24xf32>
    %cst = arith.constant dense<0.000000e+00> : vector<2x24xf32>
    %2 = tpu.matmul %0, %1, %cst {dimension_numbers = #tpu.dot_dimension_numbers<[1], [0], [0], [1], [0, 0, 1, 1], [], []>} : vector<2x32xf32>, vector<32x24xf32>, vector<2x24xf32> -> vector<2x24xf32>
    %c0_3 = arith.constant 0 : index
    %c0_4 = arith.constant 0 : index
    %3 = vector.load %arg2[%c0_3, %c0_4] : memref<1x24xf32, #tpu.memory_space<vmem>>, vector<1x24xf32>
    %4 = vector.broadcast %3 : vector<1x24xf32> to vector<2x24xf32>
    %5 = arith.addf %2, %4 : vector<2x24xf32>
    %6 = vector.extract_strided_slice %5 {offsets = [0, 0], sizes = [2, 8], strides = [1, 1]} : vector<2x24xf32> to vector<2x8xf32>
    %7 = vector.extract_strided_slice %5 {offsets = [0, 8], sizes = [2, 8], strides = [1, 1]} : vector<2x24xf32> to vector<2x8xf32>
    %8 = vector.extract_strided_slice %5 {offsets = [0, 16], sizes = [2, 8], strides = [1, 1]} : vector<2x24xf32> to vector<2x8xf32>
    %9 = arith.mulf %6, %7 : vector<2x8xf32>
    %10 = arith.addf %9, %8 : vector<2x8xf32>
    %cst_5 = arith.constant 0.353553385 : f32
    %11 = vector.broadcast %cst_5 : f32 to vector<2x8xf32>
    %12 = arith.mulf %10, %11 : vector<2x8xf32>
    %c0_6 = arith.constant 0 : index
    %c0_7 = arith.constant 0 : index
    %13 = vector.load %arg3[%c0_6, %c0_7] : memref<2x8xf32, #tpu.memory_space<vmem>>, vector<2x8xf32>
    tpu.vector_store %arg3[%c0_6, %c0_7], %12 {strides = array<i32>} : memref<2x8xf32, #tpu.memory_space<vmem>>, vector<2x8xf32>,
    return
  }
}

</mosaic_0001>

<llo_original>
// kernel: tpu_custom_call.1
$region0: #{tpu_custom_call.1}
  #allocation0 [shape = 'u32[]', space=smem, size = 0x4, offset = 0x4, fixed_abs, tag = 'smem constant byte address 0x4 - core index']
  #allocation1 [shape = 'u32[144,128]{1,0:T(1,128)}', space=vmem, size = 0x12000, scoped, tag = 'internal scratch']
  %s0 = inlined_call_operand.vmem [shape: f32[2,32], index: 0, kind: input, shape index: {}]
  %s1 = inlined_call_operand.vmem [shape: f32[32,24], index: 1, kind: input, shape index: {}]
  %s2 = inlined_call_operand.vmem [shape: f32[1,24], index: 2, kind: input, shape index: {}]
  %s3 = inlined_call_operand.hbm [shape: f32[2,8], index: 3, kind: output, shape index: {}]
  %s4 = sld [smem:[#allocation0]]
  $region22: #{tpu_custom_call.1} parent=0
    _
  %s6 = ssub.s32 1, %s4
  %s7 = scalar_select 0, %s6, %s4
  $region1: #{tpu_custom_call.1} parent=0
    #allocation2 [shape = 'u8[1024]{0}', space=vmem, size = 0x400, scoped, tag = 'output window, operand 0, single buffered']
    #allocation3 [shape = 's32[1]{0}', space=sflag, size = 0x4, scoped, tag = 'scoped memory for tpu_custom_call.1']
    %8 = vsyncpa [#allocation3], 0
    // Predicated region
    $region2: #{tpu_custom_call.1} parent=1 // pred_check
      _
    $region3: #{tpu_custom_call.1} parent=1 // pred_check_branch
      %10 = sbr.rel (0) target = $region5
    $region4: #{tpu_custom_call.1} parent=1 // pred_region
      _
    $region5: #{tpu_custom_call.1} parent=1 // pred_fallthru
      _
    // Predicated region
    $region6: #{tpu_custom_call.1} parent=1 // pred_check
      _
    $region7: #{tpu_custom_call.1} parent=1 // pred_check_branch
      %12 = sbr.rel (0) target = $region9
    $region8: #{tpu_custom_call.1} parent=1 // pred_region
      _
    $region9: #{tpu_custom_call.1} parent=1 // pred_fallthru
      _
    // Predicated region
    $region10: #{tpu_custom_call.1} parent=1 // pred_check
      _
    $region11: #{tpu_custom_call.1} parent=1 // pred_check_branch
      %14 = sbr.rel (0) target = $region13
    $region12: #{tpu_custom_call.1} parent=1 // pred_region
      _
    $region13: #{tpu_custom_call.1} parent=1 // pred_fallthru
      _
    %v15 = vld [vmem:[%s0] sm:$0x3]
    %v16 = vld [vmem:[%s1] sm:$0xff]
    %v17 = vld [vmem:[%s1 + $0x8] sm:$0xff]
    %v18 = vld [vmem:[%s1 + $0x10] sm:$0xff]
    %v19 = vld [vmem:[%s1 + $0x18] sm:$0xff]
    %v20 = vld [vmem:[%s2] sm:$0x1]
    %v22 = vlaneseq
    %v23 = vshrl.u32 %v22, 7
    %v24 = vsub.s32 0, %v23
    %v25 = vrot.slane %v20, %v24
    %vm27 = vcmask 261120
    %v29 = vsel %vm27, %v15, 0
    %31 = vmatprep.subr.mxu0 0.0
    %32 = vmatpush1.msra.mxu0 %v16
    %33 = vmatprep.subr.mxu0 0.0
    %34 = vmatpush1.msra.mxu0 %v17
    %35 = vmatprep.subr.mxu0 0.0
    %36 = vmatpush1.msra.mxu0 %v18
    %37 = vmatprep.subr.mxu0 0.0
    %38 = vmatpush1.msra.mxu0 %v19
    %39 = vmatprep.subr.mxu0 0.0
    %40 = vmatpush1.msra.mxu0 0.0
    %41 = vmatprep.subr.mxu0 0.0
    %42 = vmatpush1.msra.mxu0 0.0
    %43 = vmatprep.subr.mxu0 0.0
    %44 = vmatpush1.msra.mxu0 0.0
    %45 = vmatprep.subr.mxu0 0.0
    %46 = vmatpush1.msra.mxu0 0.0
    %47 = vmatprep.subr.mxu0 0.0
    %48 = vmatpush1.msra.mxu0 0.0
    %49 = vmatprep.subr.mxu0 0.0
    %50 = vmatpush1.msra.mxu0 0.0
    %51 = vmatprep.subr.mxu0 0.0
    %52 = vmatpush1.msra.mxu0 0.0
    %53 = vmatprep.subr.mxu0 0.0
    %54 = vmatpush1.msra.mxu0 0.0
    %55 = vmatprep.subr.mxu0 0.0
    %56 = vmatpush1.msra.mxu0 0.0
    %57 = vmatprep.subr.mxu0 0.0
    %58 = vmatpush1.msra.mxu0 0.0
    %59 = vmatprep.subr.mxu0 0.0
    %60 = vmatpush1.msra.mxu0 0.0
    %61 = vmatprep.subr.mxu0 0.0
    %62 = vmatpush1.msra.mxu0 0.0
    %63 = vmatprep.subr.mxu0 0.0
    %64 = vmatpush1.msra.mxu0 0.0
    %65 = vmatprep.subr.mxu0 0.0
    %66 = vmatpush1.msra.mxu0 0.0
    %67 = vmatprep.subr.mxu0 0.0
    %68 = vmatpush1.msra.mxu0 0.0
    %69 = vmatprep.subr.mxu0 0.0
    %70 = vmatpush1.msra.mxu0 0.0
    %71 = vmatprep.subr.mxu0 0.0
    %72 = vmatpush1.msra.mxu0 0.0
    %73 = vmatprep.subr.mxu0 0.0
    %74 = vmatpush1.msra.mxu0 0.0
    %75 = vmatprep.subr.mxu0 0.0
    %76 = vmatpush1.msra.mxu0 0.0
    %77 = vmatprep.subr.mxu0 0.0
    %78 = vmatpush1.msra.mxu0 0.0
    %79 = vmatprep.subr.mxu0 0.0
    %80 = vmatpush1.msra.mxu0 0.0
    %81 = vmatprep.subr.mxu0 0.0
    %82 = vmatpush1.msra.mxu0 0.0
    %83 = vmatprep.subr.mxu0 0.0
    %84 = vmatpush1.msra.mxu0 0.0
    %85 = vmatprep.subr.mxu0 0.0
    %86 = vmatpush1.msra.mxu0 0.0
    %87 = vmatprep.subr.mxu0 0.0
    %88 = vmatpush1.msra.mxu0 0.0
    %89 = vmatprep.subr.mxu0 0.0
    %90 = vmatpush1.msra.mxu0 0.0
    %91 = vmatprep.subr.mxu0 0.0
    %92 = vmatpush1.msra.mxu0 0.0
    %93 = vmatprep.subr.mxu0 0.0
    %94 = vmatpush1.msra.mxu0 0.0
    %95 = vmatprep.mubr.f32.mxu0 0.0
    %96 = vmatmul.mubr.f32.gmra.mrb[0].mxu0 %v29
    %v97 = vpop.f32.mrb[0].mxu0
    %v98 = vadd.f32 %v25, %v97
    %v99 = vpop.f32.mrb[0].mxu0
    %100 = vdwg.mxu0
    %102 = vrot.lane.b32.xlu0 %v98, 120
    %v103 = vpop.permute.xlu0 %102
    %v105 = vmul.f32 %v98, %v103
    %106 = vrot.lane.b32.xlu0 %v98, 112
    %v107 = vpop.permute.xlu0 %106
    %v109 = vadd.f32 %v105, %v107
    %v110 = vmul.f32 %v109, 0.35355338
    %vm111 = vcmask 58368
    %112 = vst.msk [vmem:[#allocation2] sm:$0x3] %vm111, %v110
    // Predicated region
    $region14: #{tpu_custom_call.1} parent=1 // pred_check
      _
    $region15: #{tpu_custom_call.1} parent=1 // pred_check_branch
      %114 = sbr.rel (0) target = $region17
    $region16: #{tpu_custom_call.1} parent=1 // pred_region
      %s116 = ssub.s32 32, 32
      %117 = vsyncadd [#allocation3], %s116
      %s119 = sshll.u32 [#allocation2], 4
      %s120 = int_to_ptr.vmem [resolvable:$true] %s119
      %122 = dma.vmem_to_hbm [thread:$0]  %s120, 32, %s3, [#allocation3]
    $region17: #{tpu_custom_call.1} parent=1 // pred_fallthru
      _
    // Predicated region
    $region18: #{tpu_custom_call.1} parent=1 // pred_check
      _
    $region19: #{tpu_custom_call.1} parent=1 // pred_check_branch
      %124 = sbr.rel (0) target = $region21
    $region20: #{tpu_custom_call.1} parent=1 // pred_region
      %125 = dma.done [#allocation3], 32
    $region21: #{tpu_custom_call.1} parent=1 // pred_fallthru
      _
    %126 = vsyncpa [#allocation3], 1

</llo_original>
